<compile_context>
chip_gen: v7x
topology: tpu7x:2x2x1
jax: 0.10.0
libtpu: 0.0.40
codegen_flags: <defaults>
</compile_context>

<pallas_src>
import functools
import math

import jax
import jax.numpy as jnp
from jax.experimental import pallas as pl
from jax.experimental.pallas import tpu as pltpu

# Working sets are sized so this fits comfortably inside v7x's 64 MiB
# physical VMEM per TensorCore; on v5e/v6e (128 MiB) it is ample headroom.
_VMEM_LIMIT = 40 * 1024 * 1024


def _round_up(x, m):
    return ((x + m - 1) // m) * m


def _largest_divisor_tile(n_pad, target):
    """Largest multiple of 128 that divides n_pad and is <= target."""
    t = min(target, n_pad)
    t -= t % 128
    while t > 128 and n_pad % t != 0:
        t -= 128
    return t


def choose_tiles(n):
    """(n_pad, tm, tk) for the propagate kernel.  Large tiles (tm=512, tk up
    to 2048 / n_pad) amortize the ~0.35 us fixed per-grid-step overhead to
    <10% while the double-buffered working set stays under the 40 MiB VMEM
    budget (v7x-safe)."""
    n128 = _round_up(n, 128)
    if n128 <= 512:
        return n128, n128, n128            # single tile / single k step
    n_pad = _round_up(n, 512)
    tm = 512
    tk = _largest_divisor_tile(n_pad, 2048)
    return n_pad, tm, tk


def _use_bf16_combine():
    # bf16 VALU exists on v6e/v7x; v5e (and older) keep the combine in f32.
    try:
        kind = jax.devices()[0].device_kind.lower()
    except Exception:
        kind = ""
    return ("v6" in kind) or ("v7" in kind) or ("7x" in kind)


# --------------------------------------------------------------------------
# Pallas kernel: tiled pairwise cosine similarity (rows pre-normalized)
#   S[i_blk, j_blk] = Xn[i_blk] @ Xn[j_blk]^T
# --------------------------------------------------------------------------
def _cosine_sim_kernel(xr_ref, xc_ref, s_ref):
    s_ref[...] = jax.lax.dot_general(
        xr_ref[...], xc_ref[...],
        dimension_numbers=(((1,), (1,)), ((), ())),
        preferred_element_type=jnp.float32)


def pairwise_cosine_similarity_pallas(xn, tm, tn):
    n_pad, f_pad = xn.shape
    grid = (n_pad // tm, n_pad // tn)
    return pl.pallas_call(
        _cosine_sim_kernel,
        grid=grid,
        in_specs=[
            pl.BlockSpec((tm, f_pad), lambda i, j: (i, 0)),
            pl.BlockSpec((tn, f_pad), lambda i, j: (j, 0)),
        ],
        out_specs=pl.BlockSpec((tm, tn), lambda i, j: (i, j)),
        out_shape=jax.ShapeDtypeStruct((n_pad, n_pad), jnp.float32),
        compiler_params=pltpu.CompilerParams(
            dimension_semantics=("parallel", "parallel"),
            vmem_limit_bytes=_VMEM_LIMIT),
    )(xn, xn)


# --------------------------------------------------------------------------
# Pallas kernel: per-layer projection
#   xw_cat = x @ [W | scores | d_k | 0]   (N_pad, H_pad) — one MXU matmul
#   s      = sigmoid(xw_cat[:, H]   + score_bias)
#   Dk     =          xw_cat[:, H+1] + d_bias
# xw is stored in bfloat16 (consumed in bf16 by the propagate matmul anyway).
# --------------------------------------------------------------------------
def _proj_kernel(x_ref, w_ref, gb_ref, xw_ref, s_ref, dk_ref, *, h_cols):
    xw = jnp.dot(x_ref[...], w_ref[...], preferred_element_type=jnp.float32)
    xw_ref[...] = xw.astype(jnp.bfloat16)
    gb = gb_ref[...]                                        # (1, 2)
    s_ref[...] = jax.nn.sigmoid(xw[:, h_cols:h_cols + 1] + gb[:, 0:1])
    dk_ref[...] = xw[:, h_cols + 1:h_cols + 2] + gb[:, 1:2]


def simpgcn_project(x_pad, w_cat, gate_bias, h_cols, tm_proj):
    n_pad, f_pad = x_pad.shape
    h_pad = w_cat.shape[1]
    kern = functools.partial(_proj_kernel, h_cols=h_cols)
    xw, s, dk = pl.pallas_call(
        kern,
        grid=(n_pad // tm_proj,),
        in_specs=[
            pl.BlockSpec((tm_proj, f_pad), lambda i: (i, 0)),
            pl.BlockSpec((f_pad, h_pad), lambda i: (0, 0)),
            pl.BlockSpec((1, 2), lambda i: (0, 0)),
        ],
        out_specs=[
            pl.BlockSpec((tm_proj, h_pad), lambda i: (i, 0)),
            pl.BlockSpec((tm_proj, 1), lambda i: (i, 0)),
            pl.BlockSpec((tm_proj, 1), lambda i: (i, 0)),
        ],
        out_shape=[
            jax.ShapeDtypeStruct((n_pad, h_pad), jnp.bfloat16),
            jax.ShapeDtypeStruct((n_pad, 1), jnp.float32),
            jax.ShapeDtypeStruct((n_pad, 1), jnp.float32),
        ],
        compiler_params=pltpu.CompilerParams(
            dimension_semantics=("parallel",),
            vmem_limit_bytes=_VMEM_LIMIT),
    )(x_pad, w_cat, gate_bias)
    return xw, s, dk


# --------------------------------------------------------------------------
# Pallas kernel: fused propagation + gating
#   out = (s*A + (1-s)*A_knn) @ xw  +  gamma*Dk*xw  +  (1 + gamma*Dk)*b
# which equals the original
#   s*(A@xw + b) + (1-s)*(A_knn@xw + b) + gamma*Dk*(xw + b)   (acts = identity)
# xw is a whole-array VMEM-resident bf16 block; A / A_knn stream in bf16;
# accumulation happens directly in the revisit-resident f32 output block.
# --------------------------------------------------------------------------
def _prop_gate_kernel(s_ref, dk_ref, a_ref, ak_ref, xw_ref, b_ref, o_ref,
                      *, gamma, h_cols, tm, tk, combine_bf16):
    i = pl.program_id(0)
    k = pl.program_id(1)

    @pl.when(k == 0)
    def _():
        o_ref[...] = jnp.zeros_like(o_ref)

    if combine_bf16:
        # v6e/v7x: bf16 VALU, no f32 round-trip (keeps HBM-bound, not VALU).
        s = s_ref[...].astype(jnp.bfloat16)                   # (tm, 1)
        a_comb = s * a_ref[...] + (1.0 - s) * ak_ref[...]     # bf16
    else:
        # v5e: no bf16 VPU — do the combine in f32 (hides under DMA budget).
        s = s_ref[...]                                        # (tm, 1) f32
        a = a_ref[...].astype(jnp.float32)
        ak = ak_ref[...].astype(jnp.float32)
        a_comb = (s * a + (1.0 - s) * ak).astype(jnp.bfloat16)

    col0 = pl.multiple_of(k * tk, tk)
    xw_k = xw_ref[pl.ds(col0, tk), :]                         # (tk, h_pad) bf16
    o_ref[...] += jnp.dot(a_comb, xw_k, preferred_element_type=jnp.float32)

    @pl.when(k == pl.num_programs(1) - 1)
    def _():
        row0 = pl.multiple_of(i * tm, tm)
        xw_i = xw_ref[pl.ds(row0, tm), :].astype(jnp.float32)  # (tm, h_pad)
        dk = dk_ref[...]                                       # (tm, 1)
        b = b_ref[...]                                         # (1, h_pad)
        h_pad = b.shape[1]
        # explicitly zero padded / gate columns (>= H) of the layer output
        col_mask = (jax.lax.broadcasted_iota(jnp.int32, (1, h_pad), 1)
                    < h_cols).astype(jnp.float32)
        o_ref[...] = (o_ref[...] + gamma * dk * xw_i
                      + (1.0 + gamma * dk) * b) * col_mask


def simpgcn_propagate_gate(s, dk, a_bf, ak_bf, xw_bf, b_cat, gamma, h_cols,
                           tm, tk):
    n_pad = a_bf.shape[0]
    h_pad = xw_bf.shape[1]
    grid = (n_pad // tm, n_pad // tk)
    combine_bf16 = _use_bf16_combine()
    kern = functools.partial(_prop_gate_kernel, gamma=gamma, h_cols=h_cols,
                             tm=tm, tk=tk, combine_bf16=combine_bf16)
    flops = 2 * n_pad * n_pad * h_pad + 4 * n_pad * n_pad
    bytes_accessed = (2 * n_pad * n_pad * 2          # A, A_knn streamed bf16
                      + n_pad * h_pad * 2            # xw (resident, read once)
                      + n_pad * h_pad * 4            # output write
                      + 2 * n_pad * 4                # s, Dk
                      + h_pad * 4)                   # bias
    return pl.pallas_call(
        kern,
        grid=grid,
        in_specs=[
            pl.BlockSpec((tm, 1), lambda i, k: (i, 0)),          # s
            pl.BlockSpec((tm, 1), lambda i, k: (i, 0)),          # Dk
            pl.BlockSpec((tm, tk), lambda i, k: (i, k)),         # A (bf16)
            pl.BlockSpec((tm, tk), lambda i, k: (i, k)),         # A_knn (bf16)
            pl.BlockSpec((n_pad, h_pad), lambda i, k: (0, 0)),   # xw resident
            pl.BlockSpec((1, h_pad), lambda i, k: (0, 0)),       # bias
        ],
        out_specs=pl.BlockSpec((tm, h_pad), lambda i, k: (i, 0)),
        out_shape=jax.ShapeDtypeStruct((n_pad, h_pad), jnp.float32),
        compiler_params=pltpu.CompilerParams(
            dimension_semantics=("parallel", "arbitrary"),
            vmem_limit_bytes=_VMEM_LIMIT),
        cost_estimate=pl.CostEstimate(
            flops=flops, transcendentals=0, bytes_accessed=bytes_accessed),
    )(s, dk, a_bf, ak_bf, xw_bf, b_cat)


# --------------------------------------------------------------------------
# Plain-JAX glue: graph construction / normalization / parameter packing
# --------------------------------------------------------------------------
def gcn_norm_dense(a):
    # TODO(synk): graphwar's GCNConv normalization for weighted (asymmetric)
    # SparseTensor inputs assumed to be symmetric GCN-norm with self-loops.
    n = a.shape[0]
    a_hat = a + jnp.eye(n, dtype=a.dtype)
    deg = a_hat.sum(axis=1)
    dinv = jnp.where(deg > 0, jax.lax.rsqrt(deg), 0.0)
    return a_hat * dinv[:, None] * dinv[None, :]


def knn_graph_dense(x_pad, n, k, tmc, tnc):
    # x.bool().float() -> binarize; rows pre-normalized with rsqrt (EUP).
    xb = (x_pad != 0).astype(jnp.float32)
    sq = jnp.sum(xb * xb, axis=1, keepdims=True)
    xn = xb * jnp.where(sq > 0, jax.lax.rsqrt(sq), 0.0)
    sims = pairwise_cosine_similarity_pallas(xn, tmc, tnc)[:n, :n]
    sims = sims - jnp.diag(jnp.diag(sims))
    vals, idx = jax.lax.top_k(sims, k)
    rows = jnp.repeat(jnp.arange(n), k)
    a = jnp.zeros((n, n), jnp.float32).at[rows, idx.reshape(-1)].set(
        vals.reshape(-1))
    return a


def xavier_uniform(key, shape):
    fan_in, fan_out = shape
    limit = math.sqrt(6.0 / (fan_in + fan_out))
    return jax.random.uniform(key, shape, jnp.float32, -limit, limit)


def init_simpgcn_params(key, in_channels, out_channels, hids=(64,)):
    dims = [in_channels] + list(hids) + [out_channels]
    params = []
    for i in range(len(dims) - 1):
        key, k1, k2, k3 = jax.random.split(key, 4)
        params.append(dict(
            w=xavier_uniform(k1, (dims[i], dims[i + 1])),       # GCNConv.lin
            b=jnp.zeros((dims[i + 1],), jnp.float32),           # GCNConv.bias
            scores=xavier_uniform(k2, (dims[i], 1)),
            score_bias=jnp.zeros((1,), jnp.float32),
            d_k=xavier_uniform(k3, (dims[i], 1)),
            d_bias=jnp.zeros((1,), jnp.float32),
        ))
    return params


def pack_params(params, in_channels):
    """Concatenate [W | scores | d_k] into one 128-lane-padded weight tile per
    layer; pad bias to the same width; track the true H per layer."""
    packed = []
    f_pad = _round_up(in_channels, 128)
    for p in params:
        f_in, h = p['w'].shape
        h_pad = _round_up(h + 2, 128)
        w_cat = jnp.zeros((f_pad, h_pad), jnp.float32)
        w_cat = w_cat.at[:f_in, :h].set(p['w'])
        w_cat = w_cat.at[:f_in, h].set(p['scores'][:, 0])
        w_cat = w_cat.at[:f_in, h + 1].set(p['d_k'][:, 0])
        b_cat = jnp.zeros((1, h_pad), jnp.float32).at[0, :h].set(p['b'])
        gate_bias = jnp.concatenate([p['score_bias'],
                                     p['d_bias']]).reshape(1, 2)
        packed.append(dict(w_cat=w_cat, b_cat=b_cat, gate_bias=gate_bias, h=h))
        f_pad = h_pad   # next layer consumes this layer's padded output width
    return packed


def simpgcn_forward(x_pad, a_bf, ak_bf, packed, gamma, n, out_channels,
                    tm, tk, tm_proj):
    # eval mode: dropout is identity; acts=[None, ...] -> identity.
    # TODO(synk): attr_sim / node_pairs caching (only used by regression_loss,
    # not the eval forward output) is omitted.
    h = x_pad
    for lp in packed:
        xw, s, dk = simpgcn_project(h, lp['w_cat'], lp['gate_bias'],
                                    lp['h'], tm_proj)
        h = simpgcn_propagate_gate(s, dk, a_bf, ak_bf, xw, lp['b_cat'],
                                   gamma, lp['h'], tm, tk)
    return h[:n, :out_channels]


# --------------------------------------------------------------------------
if __name__ == "__main__":
    key = jax.random.PRNGKey(0)
    N, F_IN, OUT_C = 64, 32, 8
    HIDS = [64]
    K_KNN = 20
    GAMMA = 0.01

    kx, km, kp = jax.random.split(key, 3)

    # sparse-ish node features (binarization in knn_graph is then meaningful)
    mask = jax.random.bernoulli(km, 0.6, (N, F_IN)).astype(jnp.float32)
    x = jax.random.normal(kx, (N, F_IN), jnp.float32) * mask
    x = x.at[:, 0].set(1.0)   # no all-zero rows (cosine sim well defined)

    n_pad, TM, TK = choose_tiles(N)
    TM_PROJ = _largest_divisor_tile(n_pad, 2048)
    TMC = _largest_divisor_tile(n_pad, 512)
    TNC = _largest_divisor_tile(n_pad, 1024)

    f_pad0 = _round_up(F_IN, 128)
    x_pad = jnp.zeros((n_pad, f_pad0), jnp.float32).at[:N, :F_IN].set(x)

    # input graph: undirected ring, unit edge weights
    src = jnp.arange(N)
    dst = (src + 1) % N
    a = jnp.zeros((N, N), jnp.float32).at[src, dst].set(1.0).at[dst, src].set(1.0)
    a_norm = gcn_norm_dense(a)
    a_bf = jnp.zeros((n_pad, n_pad), jnp.float32).at[:N, :N].set(
        a_norm).astype(jnp.bfloat16)

    # KNN graph from binarized features (tiled Pallas cosine-sim kernel)
    a_knn = knn_graph_dense(x_pad, N, K_KNN, TMC, TNC)
    a_knn_norm = gcn_norm_dense(a_knn)
    ak_bf = jnp.zeros((n_pad, n_pad), jnp.float32).at[:N, :N].set(
        a_knn_norm).astype(jnp.bfloat16)

    params = init_simpgcn_params(kp, F_IN, OUT_C, hids=HIDS)
    packed = pack_params(params, F_IN)

    out = simpgcn_forward(x_pad, a_bf, ak_bf, packed, GAMMA, N, OUT_C,
                          TM, TK, TM_PROJ)
    out = jax.block_until_ready(out)
    assert out.shape == (N, OUT_C)
    assert bool(jnp.all(jnp.isfinite(out)))
    print("KERNEL_OK")
</pallas_src>

<mosaic_0001>
module attributes {stable_mosaic.version = 11 : i64} {
  func.func @_cosine_sim_kernel(%arg0: i32, %arg1: i32, %arg2: memref<128x128xf32, #tpu.memory_space<vmem>>, %arg3: memref<128x128xf32, #tpu.memory_space<vmem>>, %arg4: memref<128x128xf32, #tpu.memory_space<vmem>>) attributes {dimension_semantics = [#tpu.dimension_semantics<parallel>, #tpu.dimension_semantics<parallel>], iteration_bounds = array<i64: 1, 1>, scalar_prefetch = 0 : i64, scratch_operands = 0 : i64, tpu.core_type = #tpu.core_type<tc>, window_params = [{transform_indices = @transform_0, window_bounds = array<i64: 128, 128>}, {transform_indices = @transform_1, window_bounds = array<i64: 128, 128>}, {transform_indices = @transform_2, window_bounds = array<i64: 128, 128>}]} {
    %c0 = arith.constant 0 : index
    %c0_0 = arith.constant 0 : index
    %0 = vector.load %arg2[%c0, %c0_0] : memref<128x128xf32, #tpu.memory_space<vmem>>, vector<128x128xf32>
    %c0_1 = arith.constant 0 : index
    %c0_2 = arith.constant 0 : index
    %1 = vector.load %arg3[%c0_1, %c0_2] : memref<128x128xf32, #tpu.memory_space<vmem>>, vector<128x128xf32>
    %cst = arith.constant dense<0.000000e+00> : vector<128x128xf32>
    %2 = tpu.matmul %0, %1, %cst {dimension_numbers = #tpu.dot_dimension_numbers<[1], [1], [0], [0], [0, 0, 1, 0], [], []>} : vector<128x128xf32>, vector<128x128xf32>, vector<128x128xf32> -> vector<128x128xf32>
    %c0_3 = arith.constant 0 : index
    %c0_4 = arith.constant 0 : index
    %3 = vector.load %arg4[%c0_3, %c0_4] : memref<128x128xf32, #tpu.memory_space<vmem>>, vector<128x128xf32>
    tpu.vector_store %arg4[%c0_3, %c0_4], %2 {strides = array<i32>} : memref<128x128xf32, #tpu.memory_space<vmem>>, vector<128x128xf32>,
    return
  }
  func.func @transform_0(%arg0: i32, %arg1: i32) -> (i32, i32) {
    %c0_i32 = arith.constant 0 : i32
    %c0_i32_0 = arith.constant 0 : i32
    return %arg0, %c0_i32 : i32, i32
  }
  func.func @transform_1(%arg0: i32, %arg1: i32) -> (i32, i32) {
    %c0_i32 = arith.constant 0 : i32
    %c0_i32_0 = arith.constant 0 : i32
    return %arg1, %c0_i32 : i32, i32
  }
  func.func @transform_2(%arg0: i32, %arg1: i32) -> (i32, i32) {
    %c0_i32 = arith.constant 0 : i32
    return %arg0, %arg1 : i32, i32
  }
}

</mosaic_0001>

<llo_original>
// kernel: tpu_custom_call.1
$region0: #{tpu_custom_call.1}
  #allocation0 [shape = 'u32[]', space=smem, size = 0x4, offset = 0x4, fixed_abs, tag = 'smem constant byte address 0x4 - core index']
  #allocation1 [shape = 'u32[144,128]{1,0:T(1,128)}', space=vmem, size = 0x12000, scoped, tag = 'internal scratch']
  %s0 = inlined_call_operand.hbm [shape: f32[128,128], index: 0, kind: input, shape index: {}]
  %s1 = inlined_call_operand.hbm [shape: f32[128,128], index: 1, kind: input, shape index: {}]
  %s2 = inlined_call_operand.hbm [shape: f32[128,128], index: 2, kind: output, shape index: {}]
  %s3 = sld [smem:[#allocation0]]
  $region26: #{tpu_custom_call.1} parent=0
    _
  %s5 = ssub.s32 1, %s3
  %s6 = scalar_select 0, %s5, %s3
  $region1: #{tpu_custom_call.1} parent=0
    #allocation2 [shape = 'u8[65536]{0}', space=vmem, size = 0x10000, scoped, tag = 'input window, operand 0, single buffered']
    #allocation3 [shape = 's32[1]{0}', space=sflag, size = 0x4, scoped, tag = 'scoped memory for tpu_custom_call.1']
    #allocation4 [shape = 's32[1]{0}', space=sflag, size = 0x4, scoped, tag = 'scoped memory for tpu_custom_call.1']
    #allocation5 [shape = 'u8[65536]{0}', space=vmem, size = 0x10000, scoped, tag = 'input window, operand 1, single buffered']
    #allocation6 [shape = 's32[1]{0}', space=sflag, size = 0x4, scoped, tag = 'scoped memory for tpu_custom_call.1']
    #allocation7 [shape = 'u8[65536]{0}', space=vmem, size = 0x10000, scoped, tag = 'output window, operand 0, single buffered']
    %7 = vsyncpa [#allocation3], 0
    %8 = vsyncpa [#allocation6], 0
    %9 = vsyncpa [#allocation4], 0
    // Predicated region
    $region2: #{tpu_custom_call.1} parent=1 // pred_check
      _
    $region3: #{tpu_custom_call.1} parent=1 // pred_check_branch
      %11 = sbr.rel (0) target = $region5
    $region4: #{tpu_custom_call.1} parent=1 // pred_region
      %s13 = ssub.s32 2048, 2048
      %14 = vsyncadd [#allocation3], %s13
      %s15 = sshll.u32 [#allocation2], 4
      %s16 = int_to_ptr.vmem [resolvable:$true] %s15
      %21 = dma.hbm_to_vmem [thread:$0]  %s0, 2048, %s16, [#allocation3], 128, 128, 8
    $region5: #{tpu_custom_call.1} parent=1 // pred_fallthru
      _
    // Predicated region
    $region6: #{tpu_custom_call.1} parent=1 // pred_check
      _
    $region7: #{tpu_custom_call.1} parent=1 // pred_check_branch
      %23 = sbr.rel (0) target = $region9
    $region8: #{tpu_custom_call.1} parent=1 // pred_region
      %s25 = ssub.s32 2048, 2048
      %26 = vsyncadd [#allocation6], %s25
      %s27 = sshll.u32 [#allocation5], 4
      %s28 = int_to_ptr.vmem [resolvable:$true] %s27
      %33 = dma.hbm_to_vmem [thread:$0]  %s1, 2048, %s28, [#allocation6], 128, 128, 8
    $region9: #{tpu_custom_call.1} parent=1 // pred_fallthru
      _
    // Predicated region
    $region10: #{tpu_custom_call.1} parent=1 // pred_check
      _
    $region11: #{tpu_custom_call.1} parent=1 // pred_check_branch
      %35 = sbr.rel (0) target = $region13
    $region12: #{tpu_custom_call.1} parent=1 // pred_region
      %36 = dma.done [#allocation3], 2048
    $region13: #{tpu_custom_call.1} parent=1 // pred_fallthru
      _
    // Predicated region
    $region14: #{tpu_custom_call.1} parent=1 // pred_check
      _
    $region15: #{tpu_custom_call.1} parent=1 // pred_check_branch
      %38 = sbr.rel (0) target = $region17
    $region16: #{tpu_custom_call.1} parent=1 // pred_region
      %39 = dma.done [#allocation6], 2048
    $region17: #{tpu_custom_call.1} parent=1 // pred_fallthru
      _
    %v40 = vld [vmem:[#allocation2] sm:$0xff]
    %v41 = vld [vmem:[#allocation2 + $0x8] sm:$0xff]
    %v42 = vld [vmem:[#allocation2 + $0x10] sm:$0xff]
    %v43 = vld [vmem:[#allocation2 + $0x18] sm:$0xff]
    %v44 = vld [vmem:[#allocation2 + $0x20] sm:$0xff]
    %v45 = vld [vmem:[#allocation2 + $0x28] sm:$0xff]
    %v46 = vld [vmem:[#allocation2 + $0x30] sm:$0xff]
    %v47 = vld [vmem:[#allocation2 + $0x38] sm:$0xff]
    %v48 = vld [vmem:[#allocation2 + $0x40] sm:$0xff]
    %v49 = vld [vmem:[#allocation2 + $0x48] sm:$0xff]
    %v50 = vld [vmem:[#allocation2 + $0x50] sm:$0xff]
    %v51 = vld [vmem:[#allocation2 + $0x58] sm:$0xff]
    %v52 = vld [vmem:[#allocation2 + $0x60] sm:$0xff]
    %v53 = vld [vmem:[#allocation2 + $0x68] sm:$0xff]
    %v54 = vld [vmem:[#allocation2 + $0x70] sm:$0xff]
    %v55 = vld [vmem:[#allocation2 + $0x78] sm:$0xff]
    %v56 = vld [vmem:[#allocation5] sm:$0xff]
    %v57 = vld [vmem:[#allocation5 + $0x8] sm:$0xff]
    %v58 = vld [vmem:[#allocation5 + $0x10] sm:$0xff]
    %v59 = vld [vmem:[#allocation5 + $0x18] sm:$0xff]
    %v60 = vld [vmem:[#allocation5 + $0x20] sm:$0xff]
    %v61 = vld [vmem:[#allocation5 + $0x28] sm:$0xff]
    %v62 = vld [vmem:[#allocation5 + $0x30] sm:$0xff]
    %v63 = vld [vmem:[#allocation5 + $0x38] sm:$0xff]
    %v64 = vld [vmem:[#allocation5 + $0x40] sm:$0xff]
    %v65 = vld [vmem:[#allocation5 + $0x48] sm:$0xff]
    %v66 = vld [vmem:[#allocation5 + $0x50] sm:$0xff]
    %v67 = vld [vmem:[#allocation5 + $0x58] sm:$0xff]
    %v68 = vld [vmem:[#allocation5 + $0x60] sm:$0xff]
    %v69 = vld [vmem:[#allocation5 + $0x68] sm:$0xff]
    %v70 = vld [vmem:[#allocation5 + $0x70] sm:$0xff]
    %v71 = vld [vmem:[#allocation5 + $0x78] sm:$0xff]
    %72 = vmatprep.subr.mxu0 0.0
    %73 = vmatpush1.xpose.msra.mxu0 %v56
    %74 = vmatprep.subr.mxu0 0.0
    %75 = vmatpush1.xpose.msra.mxu0 %v57
    %76 = vmatprep.subr.mxu0 0.0
    %77 = vmatpush1.xpose.msra.mxu0 %v58
    %78 = vmatprep.subr.mxu0 0.0
    %79 = vmatpush1.xpose.msra.mxu0 %v59
    %80 = vmatprep.subr.mxu0 0.0
    %81 = vmatpush1.xpose.msra.mxu0 %v60
    %82 = vmatprep.subr.mxu0 0.0
    %83 = vmatpush1.xpose.msra.mxu0 %v61
    %84 = vmatprep.subr.mxu0 0.0
    %85 = vmatpush1.xpose.msra.mxu0 %v62
    %86 = vmatprep.subr.mxu0 0.0
    %87 = vmatpush1.xpose.msra.mxu0 %v63
    %88 = vmatprep.subr.mxu0 0.0
    %89 = vmatpush1.xpose.msra.mxu0 %v64
    %90 = vmatprep.subr.mxu0 0.0
    %91 = vmatpush1.xpose.msra.mxu0 %v65
    %92 = vmatprep.subr.mxu0 0.0
    %93 = vmatpush1.xpose.msra.mxu0 %v66
    %94 = vmatprep.subr.mxu0 0.0
    %95 = vmatpush1.xpose.msra.mxu0 %v67
    %96 = vmatprep.subr.mxu0 0.0
    %97 = vmatpush1.xpose.msra.mxu0 %v68
    %98 = vmatprep.subr.mxu0 0.0
    %99 = vmatpush1.xpose.msra.mxu0 %v69
    %100 = vmatprep.subr.mxu0 0.0
    %101 = vmatpush1.xpose.msra.mxu0 %v70
    %102 = vmatprep.subr.mxu0 0.0
    %103 = vmatpush1.xpose.msra.mxu0 %v71
    %104 = vmatprep.subr.mxu0 0.0
    %105 = vmatpush1.xpose.msra.mxu0 0.0
    %106 = vmatprep.subr.mxu0 0.0
    %107 = vmatpush1.xpose.msra.mxu0 0.0
    %108 = vmatprep.subr.mxu0 0.0
    %109 = vmatpush1.xpose.msra.mxu0 0.0
    %110 = vmatprep.subr.mxu0 0.0
    %111 = vmatpush1.xpose.msra.mxu0 0.0
    %112 = vmatprep.subr.mxu0 0.0
    %113 = vmatpush1.xpose.msra.mxu0 0.0
    %114 = vmatprep.subr.mxu0 0.0
    %115 = vmatpush1.xpose.msra.mxu0 0.0
    %116 = vmatprep.subr.mxu0 0.0
    %117 = vmatpush1.xpose.msra.mxu0 0.0
    %118 = vmatprep.subr.mxu0 0.0
    %119 = vmatpush1.xpose.msra.mxu0 0.0
    %120 = vmatprep.subr.mxu0 0.0
    %121 = vmatpush1.xpose.msra.mxu0 0.0
    %122 = vmatprep.subr.mxu0 0.0
    %123 = vmatpush1.xpose.msra.mxu0 0.0
    %124 = vmatprep.subr.mxu0 0.0
    %125 = vmatpush1.xpose.msra.mxu0 0.0
    %126 = vmatprep.subr.mxu0 0.0
    %127 = vmatpush1.xpose.msra.mxu0 0.0
    %128 = vmatprep.subr.mxu0 0.0
    %129 = vmatpush1.xpose.msra.mxu0 0.0
    %130 = vmatprep.subr.mxu0 0.0
    %131 = vmatpush1.xpose.msra.mxu0 0.0
    %132 = vmatprep.subr.mxu0 0.0
    %133 = vmatpush1.xpose.msra.mxu0 0.0
    %134 = vmatprep.subr.mxu0 0.0
    %135 = vmatpush1.xpose.msra.mxu0 0.0
    %136 = vmatprep.mubr.f32.mxu0 0.0
    %137 = vmatmul.mubr.f32.gmra.mrb[0].mxu0 %v40
    %v138 = vpop.f32.mrb[0].mxu0
    %v139 = vadd.f32 0.0, %v138
    %v140 = vpop.f32.mrb[0].mxu0
    %141 = vmatprep.mubr.f32.mxu0 0.0
    %142 = vmatmul.mubr.f32.gmra.mrb[0].mxu0 %v41
    %v143 = vpop.f32.mrb[0].mxu0
    %v144 = vadd.f32 0.0, %v143
    %v145 = vpop.f32.mrb[0].mxu0
    %146 = vmatprep.mubr.f32.mxu0 0.0
    %147 = vmatmul.mubr.f32.gmra.mrb[0].mxu0 %v42
    %v148 = vpop.f32.mrb[0].mxu0
    %v149 = vadd.f32 0.0, %v148
    %v150 = vpop.f32.mrb[0].mxu0
    %151 = vmatprep.mubr.f32.mxu0 0.0
    %152 = vmatmul.mubr.f32.gmra.mrb[0].mxu0 %v43
    %v153 = vpop.f32.mrb[0].mxu0
    %v154 = vadd.f32 0.0, %v153
    %v155 = vpop.f32.mrb[0].mxu0
    %156 = vmatprep.mubr.f32.mxu0 0.0
    %157 = vmatmul.mubr.f32.gmra.mrb[0].mxu0 %v44
    %v158 = vpop.f32.mrb[0].mxu0
    %v159 = vadd.f32 0.0, %v158
    %v160 = vpop.f32.mrb[0].mxu0
    %161 = vmatprep.mubr.f32.mxu0 0.0
    %162 = vmatmul.mubr.f32.gmra.mrb[0].mxu0 %v45
    %v163 = vpop.f32.mrb[0].mxu0
    %v164 = vadd.f32 0.0, %v163
    %v165 = vpop.f32.mrb[0].mxu0
    %166 = vmatprep.mubr.f32.mxu0 0.0
    %167 = vmatmul.mubr.f32.gmra.mrb[0].mxu0 %v46
    %v168 = vpop.f32.mrb[0].mxu0
    %v169 = vadd.f32 0.0, %v168
    %v170 = vpop.f32.mrb[0].mxu0
    %171 = vmatprep.mubr.f32.mxu0 0.0
    %172 = vmatmul.mubr.f32.gmra.mrb[0].mxu0 %v47
    %v173 = vpop.f32.mrb[0].mxu0
    %v174 = vadd.f32 0.0, %v173
    %v175 = vpop.f32.mrb[0].mxu0
    %176 = vmatprep.mubr.f32.mxu0 0.0
    %177 = vmatmul.mubr.f32.gmra.mrb[0].mxu0 %v48
    %v178 = vpop.f32.mrb[0].mxu0
    %v179 = vadd.f32 0.0, %v178
    %v180 = vpop.f32.mrb[0].mxu0
    %181 = vmatprep.mubr.f32.mxu0 0.0
    %182 = vmatmul.mubr.f32.gmra.mrb[0].mxu0 %v49
    %v183 = vpop.f32.mrb[0].mxu0
    %v184 = vadd.f32 0.0, %v183
    %v185 = vpop.f32.mrb[0].mxu0
    %186 = vmatprep.mubr.f32.mxu0 0.0
    %187 = vmatmul.mubr.f32.gmra.mrb[0].mxu0 %v50
    %v188 = vpop.f32.mrb[0].mxu0
    %v189 = vadd.f32 0.0, %v188
    %v190 = vpop.f32.mrb[0].mxu0
    %191 = vmatprep.mubr.f32.mxu0 0.0
    %192 = vmatmul.mubr.f32.gmra.mrb[0].mxu0 %v51
    %v193 = vpop.f32.mrb[0].mxu0
    %v194 = vadd.f32 0.0, %v193
    %v195 = vpop.f32.mrb[0].mxu0
    %196 = vmatprep.mubr.f32.mxu0 0.0
    %197 = vmatmul.mubr.f32.gmra.mrb[0].mxu0 %v52
    %v198 = vpop.f32.mrb[0].mxu0
    %v199 = vadd.f32 0.0, %v198
    %v200 = vpop.f32.mrb[0].mxu0
    %201 = vmatprep.mubr.f32.mxu0 0.0
    %202 = vmatmul.mubr.f32.gmra.mrb[0].mxu0 %v53
    %v203 = vpop.f32.mrb[0].mxu0
    %v204 = vadd.f32 0.0, %v203
    %v205 = vpop.f32.mrb[0].mxu0
    %206 = vmatprep.mubr.f32.mxu0 0.0
    %207 = vmatmul.mubr.f32.gmra.mrb[0].mxu0 %v54
    %v208 = vpop.f32.mrb[0].mxu0
    %v209 = vadd.f32 0.0, %v208
    %v210 = vpop.f32.mrb[0].mxu0
    %211 = vmatprep.mubr.f32.mxu0 0.0
    %212 = vmatmul.mubr.f32.gmra.mrb[0].mxu0 %v55
    %v213 = vpop.f32.mrb[0].mxu0
    %v214 = vadd.f32 0.0, %v213
    %v215 = vpop.f32.mrb[0].mxu0
    %216 = vdwg.mxu0
    %217 = vst [vmem:[#allocation7] sm:$0xff] %v139
    %218 = vst [vmem:[#allocation7 + $0x8] sm:$0xff] %v144
    %219 = vst [vmem:[#allocation7 + $0x10] sm:$0xff] %v149
    %220 = vst [vmem:[#allocation7 + $0x18] sm:$0xff] %v154
    %221 = vst [vmem:[#allocation7 + $0x20] sm:$0xff] %v159
    %222 = vst [vmem:[#allocation7 + $0x28] sm:$0xff] %v164
    %223 = vst [vmem:[#allocation7 + $0x30] sm:$0xff] %v169
    %224 = vst [vmem:[#allocation7 + $0x38] sm:$0xff] %v174
    %225 = vst [vmem:[#allocation7 + $0x40] sm:$0xff] %v179
    %226 = vst [vmem:[#allocation7 + $0x48] sm:$0xff] %v184
    %227 = vst [vmem:[#allocation7 + $0x50] sm:$0xff] %v189
    %228 = vst [vmem:[#allocation7 + $0x58] sm:$0xff] %v194
    %229 = vst [vmem:[#allocation7 + $0x60] sm:$0xff] %v199
    %230 = vst [vmem:[#allocation7 + $0x68] sm:$0xff] %v204
    %231 = vst [vmem:[#allocation7 + $0x70] sm:$0xff] %v209
    %232 = vst [vmem:[#allocation7 + $0x78] sm:$0xff] %v214
    // Predicated region
    $region18: #{tpu_custom_call.1} parent=1 // pred_check
      _
    $region19: #{tpu_custom_call.1} parent=1 // pred_check_branch
      %234 = sbr.rel (0) target = $region21
    $region20: #{tpu_custom_call.1} parent=1 // pred_region
      %s236 = ssub.s32 2048, 2048
      %237 = vsyncadd [#allocation4], %s236
      %s238 = sshll.u32 [#allocation7], 4
      %s239 = int_to_ptr.vmem [resolvable:$true] %s238
      %244 = dma.vmem_to_hbm [thread:$0]  %s239, 2048, %s2, [#allocation4], 128, 128, 8
    $region21: #{tpu_custom_call.1} parent=1 // pred_fallthru
      _
    // Predicated region
    $region22: #{tpu_custom_call.1} parent=1 // pred_check
      _
    $region23: #{tpu_custom_call.1} parent=1 // pred_check_branch
      %246 = sbr.rel (0) target = $region25
    $region24: #{tpu_custom_call.1} parent=1 // pred_region
      %247 = dma.done [#allocation4], 2048
    $region25: #{tpu_custom_call.1} parent=1 // pred_fallthru
      _
    %248 = vsyncpa [#allocation3], 1
    %249 = vsyncpa [#allocation6], 1
    %250 = vsyncpa [#allocation4], 1

</llo_original>
